<compile_context>
chip_gen: v6e
topology: v6e:2x2x1
jax: 0.10.0
libtpu: 0.0.40
codegen_flags: <defaults>
</compile_context>

<pallas_src>
import functools

import jax
import jax.numpy as jnp
import numpy as np
from jax import lax
from jax.experimental import pallas as pl
from jax.experimental.pallas import tpu as pltpu

_TN = 1024       # lane-axis tile (multiple of 128)
_BN_EPS = 1e-5   # PyTorch BatchNorm3d default eps


# ---------------------------------------------------------------------------
# Pallas kernels
# ---------------------------------------------------------------------------
def _channel_matmul_kernel(x_ref, w_ref, s_ref, t_ref, o_ref, *, relu):
    """out = act((W @ x) * s + t) for one (batch, N-tile) block.

    x_ref: (1, K, TN)  K = C_in (1x1 conv) or 27*C_in (im2col'd 3x3x3 conv)
    w_ref: (C_out, K); s_ref/t_ref: (C_out, 1) folded BN scale/shift (or 1/0)
    o_ref: (1, C_out, TN)
    """
    x = x_ref[0]
    w = w_ref[...]
    y = jnp.dot(w, x, preferred_element_type=jnp.float32)
    y = y * s_ref[...] + t_ref[...]
    if relu:
        y = jnp.maximum(y, 0.0)
    o_ref[0] = y.astype(o_ref.dtype)


def _bn_relu_kernel(x_ref, s_ref, t_ref, o_ref):
    """Pre-activation BatchNorm (folded) + ReLU: out = max(x*s + t, 0)."""
    y = x_ref[0] * s_ref[...] + t_ref[...]
    o_ref[0] = jnp.maximum(y, 0.0).astype(o_ref.dtype)


def _pool_kernel(x_ref, o_ref, *, op):
    """2x2x2 pooling: reduce the 8 stacked shifted views.

    x_ref: (1, 8, C, Nq) ; o_ref: (1, C, Nq)
    """
    x = x_ref[0]
    if op == "max":
        r = jnp.max(x, axis=0)
    else:  # average: exact multiply instead of per-element divide
        r = jnp.sum(x, axis=0) * 0.125
    o_ref[0] = r.astype(o_ref.dtype)


def _head_kernel(x_ref, wt_ref, b_ref, o_ref):
    """adaptive_avg_pool3d((1,1,1)) -> flatten -> Linear -> softmax.

    x_ref: (B, C, N); wt_ref: (C, num_classes); b_ref: (1, num_classes)
    o_ref: (B, num_classes)
    """
    x = x_ref[...]
    gap = jnp.mean(x, axis=2)                                       # (B, C)
    logits = jnp.dot(gap, wt_ref[...],
                     preferred_element_type=jnp.float32) + b_ref[...]
    m = jnp.max(logits, axis=1, keepdims=True)
    e = jnp.exp(logits - m)
    o_ref[...] = (e / jnp.sum(e, axis=1, keepdims=True)).astype(o_ref.dtype)


# ---------------------------------------------------------------------------
# Pallas-call wrappers
# ---------------------------------------------------------------------------
def _tile_n(n):
    return _TN if (n >= _TN and n % _TN == 0) else n


def _channel_matmul(x2, w2, scale, shift, *, relu):
    """x2: (B, K, N) -> (B, C_out, N) = act((w2 @ x2) * scale + shift)."""
    B, K, N = x2.shape
    c_out = w2.shape[0]
    tn = _tile_n(N)
    return pl.pallas_call(
        functools.partial(_channel_matmul_kernel, relu=relu),
        out_shape=jax.ShapeDtypeStruct((B, c_out, N), jnp.float32),
        grid=(B, N // tn),
        in_specs=[
            pl.BlockSpec((1, K, tn), lambda b, n: (b, 0, n)),
            pl.BlockSpec((c_out, K), lambda b, n: (0, 0)),
            pl.BlockSpec((c_out, 1), lambda b, n: (0, 0)),
            pl.BlockSpec((c_out, 1), lambda b, n: (0, 0)),
        ],
        out_specs=pl.BlockSpec((1, c_out, tn), lambda b, n: (b, 0, n)),
        compiler_params=pltpu.CompilerParams(
            dimension_semantics=("parallel", "parallel")),
    )(x2, w2, scale, shift)


def _bn_relu(x2, scale, shift):
    B, C, N = x2.shape
    tn = _tile_n(N)
    return pl.pallas_call(
        _bn_relu_kernel,
        out_shape=jax.ShapeDtypeStruct((B, C, N), jnp.float32),
        grid=(B, N // tn),
        in_specs=[
            pl.BlockSpec((1, C, tn), lambda b, n: (b, 0, n)),
            pl.BlockSpec((C, 1), lambda b, n: (0, 0)),
            pl.BlockSpec((C, 1), lambda b, n: (0, 0)),
        ],
        out_specs=pl.BlockSpec((1, C, tn), lambda b, n: (b, 0, n)),
        compiler_params=pltpu.CompilerParams(
            dimension_semantics=("parallel", "parallel")),
    )(x2, scale, shift)


def _pool(x2, dims, op):
    B, C, N = x2.shape
    D, H, W = dims
    x5 = x2.reshape(B, C, D, H, W)
    nq = (D // 2) * (H // 2) * (W // 2)
    views = [x5[:, :, dd::2, dh::2, dw::2].reshape(B, C, nq)
             for dd in range(2) for dh in range(2) for dw in range(2)]
    stacked = jnp.stack(views, axis=1)                        # (B, 8, C, Nq)
    out = pl.pallas_call(
        functools.partial(_pool_kernel, op=op),
        out_shape=jax.ShapeDtypeStruct((B, C, nq), jnp.float32),
        grid=(B,),
        in_specs=[pl.BlockSpec((1, 8, C, nq), lambda b: (b, 0, 0, 0))],
        out_specs=pl.BlockSpec((1, C, nq), lambda b: (b, 0, 0)),
        compiler_params=pltpu.CompilerParams(
            dimension_semantics=("parallel",)),
    )(stacked)
    return out, (D // 2, H // 2, W // 2)


def _head(x2, fc_w, fc_b):
    B, _, _ = x2.shape
    k = fc_w.shape[0]
    return pl.pallas_call(
        _head_kernel,
        out_shape=jax.ShapeDtypeStruct((B, k), jnp.float32),
    )(x2, fc_w.T, fc_b.reshape(1, k))


# ---------------------------------------------------------------------------
# Layout plumbing (pure data movement, done in JAX)
# ---------------------------------------------------------------------------
def _im2col_3x3(x2, dims):
    """(B, C, N) -> (B, 27*C, N): zero-padded 3x3x3 stencil neighborhoods."""
    B, C, N = x2.shape
    D, H, W = dims
    x5 = x2.reshape(B, C, D, H, W)
    xp = jnp.pad(x5, ((0, 0), (0, 0), (1, 1), (1, 1), (1, 1)))
    taps = [xp[:, :, kd:kd + D, kh:kh + H, kw:kw + W]
            for kd in range(3) for kh in range(3) for kw in range(3)]
    p = jnp.stack(taps, axis=2)                               # (B, C, 27, D, H, W)
    return p.reshape(B, C * 27, N)


def _fold_bn(bn):
    """Inference-mode BatchNorm3d folded to per-channel scale/shift columns."""
    scale = bn["gamma"] / jnp.sqrt(bn["var"] + _BN_EPS)
    shift = bn["beta"] - bn["mean"] * scale
    return (scale.reshape(-1, 1).astype(jnp.float32),
            shift.reshape(-1, 1).astype(jnp.float32))


def _ones_col(c):
    return jnp.ones((c, 1), jnp.float32)


def _zeros_col(c):
    return jnp.zeros((c, 1), jnp.float32)


# ---------------------------------------------------------------------------
# TaskInducedDiscriminator forward (Pallas path)
# ---------------------------------------------------------------------------
def _conv3x3(x2, dims, w, scale, shift, *, relu):
    patches = _im2col_3x3(x2, dims)
    return _channel_matmul(patches, w.reshape(w.shape[0], -1),
                           scale, shift, relu=relu)


def _dense_layer(x2, dims, p):
    s, t = _fold_bn(p["bn"])
    a = _bn_relu(x2, s, t)                                   # BN -> ReLU
    g = p["w"].shape[0]
    out = _conv3x3(a, dims, p["w"], _ones_col(g), _zeros_col(g), relu=False)
    return jnp.concatenate([x2, out], axis=1)                # cat([x, out], dim=1)


def _dense_block(x2, dims, p):
    x2 = _dense_layer(x2, dims, p["layer1"])
    x2 = _dense_layer(x2, dims, p["layer2"])
    return x2


def _transition(x2, dims, p):
    s, t = _fold_bn(p["bn"])
    a = _bn_relu(x2, s, t)
    c_out = p["w"].shape[0]
    y = _channel_matmul(a, p["w"].reshape(c_out, -1),        # 1x1x1 conv
                        _ones_col(c_out), _zeros_col(c_out), relu=False)
    return _pool(y, dims, "avg")


def task_induced_discriminator(x, params):
    """x: (B, in_channels, D, H, W) f32 -> class probabilities (B, num_classes)."""
    B, C, D, H, W = x.shape
    dims = (D, H, W)
    x2 = x.reshape(B, C, D * H * W)

    # init_conv: Conv3d(k=3, no bias) -> BN -> ReLU -> MaxPool(2)
    s, t = _fold_bn(params["init"]["bn"])
    h = _conv3x3(x2, dims, params["init"]["w"], s, t, relu=True)
    h, dims = _pool(h, dims, "max")

    h = _dense_block(h, dims, params["db1"])
    h, dims = _transition(h, dims, params["trans1"])
    h = _dense_block(h, dims, params["db2"])
    h, dims = _transition(h, dims, params["trans2"])
    h = _dense_block(h, dims, params["db3"])
    h, dims = _transition(h, dims, params["trans3"])
    h = _dense_block(h, dims, params["db4"])

    # final_conv: Conv3d(k=3, no bias) -> ReLU -> MaxPool(2)
    cf = params["final"]["w"].shape[0]
    h = _conv3x3(h, dims, params["final"]["w"],
                 _ones_col(cf), _zeros_col(cf), relu=True)
    h, dims = _pool(h, dims, "max")

    # adaptive_avg_pool3d((1,1,1)) -> flatten -> Linear -> softmax(dim=1)
    return _head(h, params["fc"]["w"], params["fc"]["b"])


# ---------------------------------------------------------------------------
# Pure-JAX reference (independent path: XLA convs / reduce_window)
# ---------------------------------------------------------------------------
def _reference(x, params):
    def bn(h, p):
        shp = (1, -1, 1, 1, 1)
        return ((h - p["mean"].reshape(shp)) /
                jnp.sqrt(p["var"].reshape(shp) + _BN_EPS) *
                p["gamma"].reshape(shp) + p["beta"].reshape(shp))

    def conv(h, w, pad):
        return lax.conv_general_dilated(
            h, w, (1, 1, 1), [(pad, pad)] * 3,
            dimension_numbers=("NCDHW", "OIDHW", "NCDHW"),
            precision=lax.Precision.HIGHEST)

    def maxpool(h):
        return lax.reduce_window(h, -jnp.inf, lax.max,
                                 (1, 1, 2, 2, 2), (1, 1, 2, 2, 2), "VALID")

    def avgpool(h):
        s = lax.reduce_window(h, 0.0, lax.add,
                              (1, 1, 2, 2, 2), (1, 1, 2, 2, 2), "VALID")
        return s / 8.0

    def dense_layer(h, p):
        out = conv(jax.nn.relu(bn(h, p["bn"])), p["w"], 1)
        return jnp.concatenate([h, out], axis=1)

    def dense_block(h, p):
        return dense_layer(dense_layer(h, p["layer1"]), p["layer2"])

    def transition(h, p):
        return avgpool(conv(jax.nn.relu(bn(h, p["bn"])), p["w"], 0))

    h = maxpool(jax.nn.relu(bn(conv(x, params["init"]["w"], 1),
                               params["init"]["bn"])))
    h = dense_block(h, params["db1"]); h = transition(h, params["trans1"])
    h = dense_block(h, params["db2"]); h = transition(h, params["trans2"])
    h = dense_block(h, params["db3"]); h = transition(h, params["trans3"])
    h = dense_block(h, params["db4"])
    h = maxpool(jax.nn.relu(conv(h, params["final"]["w"], 1)))
    gap = jnp.mean(h, axis=(2, 3, 4))
    logits = gap @ params["fc"]["w"].T + params["fc"]["b"]
    return jax.nn.softmax(logits, axis=1)


# ---------------------------------------------------------------------------
# Deterministic synthetic parameters
# ---------------------------------------------------------------------------
def _make_params(key, in_channels=1, num_classes=2, growth_rate=16):
    keys = iter(jax.random.split(key, 96))

    def conv_w(c_out, c_in, k):
        fan_in = c_in * k ** 3
        return (jax.random.normal(next(keys), (c_out, c_in, k, k, k),
                                  jnp.float32) / np.sqrt(fan_in))

    def bn_p(c):
        return dict(
            gamma=1.0 + 0.1 * jax.random.normal(next(keys), (c,), jnp.float32),
            beta=0.1 * jax.random.normal(next(keys), (c,), jnp.float32),
            mean=0.1 * jax.random.normal(next(keys), (c,), jnp.float32),
            var=jax.random.uniform(next(keys), (c,), jnp.float32, 0.5, 1.5))

    params = {"init": dict(w=conv_w(32, in_channels, 3), bn=bn_p(32))}
    nf = 32
    for i in (1, 2, 3, 4):
        params[f"db{i}"] = dict(
            layer1=dict(bn=bn_p(nf), w=conv_w(growth_rate, nf, 3)),
            layer2=dict(bn=bn_p(nf + growth_rate),
                        w=conv_w(growth_rate, nf + growth_rate, 3)))
        nf += 2 * growth_rate
        if i < 4:
            params[f"trans{i}"] = dict(bn=bn_p(nf), w=conv_w(nf // 2, nf, 1))
            nf //= 2
    params["final"] = dict(w=conv_w(nf, nf, 3))
    params["fc"] = dict(
        w=jax.random.normal(next(keys), (num_classes, nf),
                            jnp.float32) / np.sqrt(nf),
        b=0.1 * jax.random.normal(next(keys), (num_classes,), jnp.float32))
    return params


if __name__ == "__main__":
    # The network halves each spatial dim 5 times, so spatial must be >= 32.
    B, C_in, D, H, W = 2, 1, 32, 32, 32
    key = jax.random.PRNGKey(0)
    kx, kp = jax.random.split(key)
    x = jax.random.normal(kx, (B, C_in, D, H, W), dtype=jnp.float32)
    params = _make_params(kp)

    out = task_induced_discriminator(x, params)
    out = jax.block_until_ready(out)

    ref = _reference(x, params)
    np.testing.assert_allclose(np.asarray(out), np.asarray(ref),
                               rtol=2e-3, atol=2e-3)
    np.testing.assert_allclose(np.asarray(out).sum(axis=1), np.ones(B),
                               rtol=1e-5, atol=1e-5)
    print("KERNEL_OK")
</pallas_src>

<mosaic_0001>
module attributes {stable_mosaic.version = 11 : i64} {
  func.func @_channel_matmul_kernel(%arg0: i32, %arg1: i32, %arg2: memref<1x27x1024xf32, #tpu.memory_space<vmem>>, %arg3: memref<32x27xf32, #tpu.memory_space<vmem>>, %arg4: memref<32x1xf32, #tpu.memory_space<vmem>>, %arg5: memref<32x1xf32, #tpu.memory_space<vmem>>, %arg6: memref<1x32x1024xf32, #tpu.memory_space<vmem>>) attributes {dimension_semantics = [#tpu.dimension_semantics<parallel>, #tpu.dimension_semantics<parallel>], iteration_bounds = array<i64: 2, 32>, scalar_prefetch = 0 : i64, scratch_operands = 0 : i64, tpu.core_type = #tpu.core_type<tc>, window_params = [{transform_indices = @transform_0, window_bounds = array<i64: 1, 27, 1024>}, {pipeline_mode = #tpu.pipeline_mode<synchronous>, transform_indices = @transform_1, window_bounds = array<i64: 32, 27>}, {pipeline_mode = #tpu.pipeline_mode<synchronous>, transform_indices = @transform_2, window_bounds = array<i64: 32, 1>}, {pipeline_mode = #tpu.pipeline_mode<synchronous>, transform_indices = @transform_3, window_bounds = array<i64: 32, 1>}, {transform_indices = @transform_4, window_bounds = array<i64: 1, 32, 1024>}]} {
    %c0 = arith.constant 0 : index
    %c0_0 = arith.constant 0 : index
    %c0_1 = arith.constant 0 : index
    %0 = vector.load %arg2[%c0, %c0_0, %c0_1] : memref<1x27x1024xf32, #tpu.memory_space<vmem>>, vector<1x27x1024xf32>
    %1 = vector.shape_cast %0 : vector<1x27x1024xf32> to vector<27x1024xf32>
    %c0_2 = arith.constant 0 : index
    %c0_3 = arith.constant 0 : index
    %2 = vector.load %arg3[%c0_2, %c0_3] : memref<32x27xf32, #tpu.memory_space<vmem>>, vector<32x27xf32>
    %cst = arith.constant dense<0.000000e+00> : vector<32x1024xf32>
    %3 = tpu.matmul %2, %1, %cst {dimension_numbers = #tpu.dot_dimension_numbers<[1], [0], [0], [1], [0, 0, 1, 1], [], []>} : vector<32x27xf32>, vector<27x1024xf32>, vector<32x1024xf32> -> vector<32x1024xf32>
    %c0_4 = arith.constant 0 : index
    %c0_5 = arith.constant 0 : index
    %4 = vector.load %arg4[%c0_4, %c0_5] : memref<32x1xf32, #tpu.memory_space<vmem>>, vector<32x1xf32>
    %5 = vector.broadcast %4 : vector<32x1xf32> to vector<32x1024xf32>
    %6 = arith.mulf %3, %5 : vector<32x1024xf32>
    %c0_6 = arith.constant 0 : index
    %c0_7 = arith.constant 0 : index
    %7 = vector.load %arg5[%c0_6, %c0_7] : memref<32x1xf32, #tpu.memory_space<vmem>>, vector<32x1xf32>
    %8 = vector.broadcast %7 : vector<32x1xf32> to vector<32x1024xf32>
    %9 = arith.addf %6, %8 : vector<32x1024xf32>
    %cst_8 = arith.constant 0.000000e+00 : f32
    %10 = vector.broadcast %cst_8 : f32 to vector<32x1024xf32>
    %11 = arith.maximumf %9, %10 : vector<32x1024xf32>
    %c0_9 = arith.constant 0 : index
    %c0_10 = arith.constant 0 : index
    %c0_11 = arith.constant 0 : index
    %12 = vector.load %arg6[%c0_9, %c0_10, %c0_11] : memref<1x32x1024xf32, #tpu.memory_space<vmem>>, vector<1x32x1024xf32>
    %13 = vector.shape_cast %12 : vector<1x32x1024xf32> to vector<32x1024xf32>
    %14 = vector.shape_cast %11 : vector<32x1024xf32> to vector<1x32x1024xf32>
    tpu.vector_store %arg6[%c0_9, %c0_10, %c0_11], %14 {strides = array<i32>} : memref<1x32x1024xf32, #tpu.memory_space<vmem>>, vector<1x32x1024xf32>,
    return
  }
  func.func @transform_0(%arg0: i32, %arg1: i32) -> (i32, i32, i32) {
    %c0_i32 = arith.constant 0 : i32
    %c0_i32_0 = arith.constant 0 : i32
    return %arg0, %c0_i32, %arg1 : i32, i32, i32
  }
  func.func @transform_1(%arg0: i32, %arg1: i32) -> (i32, i32) {
    %c0_i32 = arith.constant 0 : i32
    %c0_i32_0 = arith.constant 0 : i32
    %c0_i32_1 = arith.constant 0 : i32
    return %c0_i32, %c0_i32_0 : i32, i32
  }
  func.func @transform_2(%arg0: i32, %arg1: i32) -> (i32, i32) {
    %c0_i32 = arith.constant 0 : i32
    %c0_i32_0 = arith.constant 0 : i32
    %c0_i32_1 = arith.constant 0 : i32
    return %c0_i32, %c0_i32_0 : i32, i32
  }
  func.func @transform_3(%arg0: i32, %arg1: i32) -> (i32, i32) {
    %c0_i32 = arith.constant 0 : i32
    %c0_i32_0 = arith.constant 0 : i32
    %c0_i32_1 = arith.constant 0 : i32
    return %c0_i32, %c0_i32_0 : i32, i32
  }
  func.func @transform_4(%arg0: i32, %arg1: i32) -> (i32, i32, i32) {
    %c0_i32 = arith.constant 0 : i32
    %c0_i32_0 = arith.constant 0 : i32
    return %arg0, %c0_i32, %arg1 : i32, i32, i32
  }
}

</mosaic_0001>

<llo_original>
// kernel: tpu_custom_call.1
$region0: #{tpu_custom_call.1}
  #allocation0 [shape = 'u32[]', space=smem, size = 0x4, offset = 0x4, fixed_abs, tag = 'smem constant byte address 0x4 - core index']
  #allocation1 [shape = 'u32[144,128]{1,0:T(1,128)}', space=vmem, size = 0x12000, scoped, tag = 'internal scratch']
  %s0 = inlined_call_operand.vmem [shape: f32[2,27,32768], index: 0, kind: input, shape index: {}]
  %s1 = inlined_call_operand.vmem [shape: f32[32,27], index: 1, kind: input, shape index: {}]
  %s2 = inlined_call_operand.vmem [shape: f32[32,1], index: 2, kind: input, shape index: {}]
  %s3 = inlined_call_operand.vmem [shape: f32[32,1], index: 3, kind: input, shape index: {}]
  %s4 = inlined_call_operand.hbm [shape: f32[2,32,32768], index: 4, kind: output, shape index: {}]
  %s5 = sld [smem:[#allocation0]]
  $region72: #{tpu_custom_call.1} parent=0
    _
  %s7 = ssub.s32 1, %s5
  %s8 = scalar_select 0, %s7, %s5
  $region1: #{tpu_custom_call.1} parent=0
    #allocation2 [shape = 'u8[262144]{0}', space=vmem, size = 0x40000, scoped, tag = 'input window, operand 0']
    #allocation3 [shape = 'u8[262144]{0}', space=vmem, size = 0x40000, scoped, tag = 'output window, operand 0']
    #allocation4 [shape = 's32[2]{0}', space=sflag, size = 0x8, scoped, tag = 'scoped memory for tpu_custom_call.1']
    %9 = vsyncpa [#allocation4], 0
    %s10 = scalar_lea.sflag [#allocation4], 1
    %11 = vsyncpa %s10, 0
    loop: start=0, step=1, limit=66
    $region2: #{tpu_custom_call.1} parent=1 // loop_pre_header
      _
    $region3: #{tpu_custom_call.1} parent=1 // loop_header
      %s13 = sphi 0, %s17
      %p14 = scmp.ge.s32.totalorder %s13, 66
      %s20 = sphi 0, %s32
      %s21 = sphi 0, %s28
      %s22 = sphi 0, %s20
      %s23 = sphi 0, %s21
      %s24 = sphi 0, %s22
      %s25 = sphi 0, %s23
      %s37 = sphi 0, %s39
      %s40 = sphi 0, %s37
      %s41 = sphi 0, %s40
      %s57 = sphi 0, %s41
      %s61 = sphi 0, %s61
      %s63 = sphi 0, %s61
      %s64 = sphi 0, %s63
      %s78 = sphi 0, %s64
      %s82 = sphi 0, %s82
      %s84 = sphi 0, %s82
      %s85 = sphi 0, %s84
      %s99 = sphi 0, %s85
      %s103 = sphi 0, %s103
      %s105 = sphi 0, %s103
      %s106 = sphi 0, %s105
      %s120 = sphi 0, %s106
      %s128 = sphi 0, %s130
      %s131 = sphi 0, %s128
      %s132 = sphi 0, %s131
      %s148 = sphi 0, %s132
    $region4: #{tpu_custom_call.1} parent=1 // loop_header_branch
      %16 = sbr.rel (%p14) target = $region8
    $region5: #{tpu_custom_call.1} parent=1 // loop_body
      %s18 = ssub.s32 %s13, 1
      %s19 = ssub.s32 %s13, 2
      %s26 = sadd.s32 1, %s21
      %p27 = scmp.ge.s32.totalorder %s26, 32
      %s28 = scalar_select %p27, 0, %s26
      %s29 = sadd.s32 1, %s20
      %s30 = scalar_select %p27, %s29, %s20
      %p31 = scmp.ge.s32.totalorder %s30, 2
      %s32 = scalar_select %p31, 0, %s30
      %s33 = ssub.s32 %s20, %s32
      %s34 = ssub.s32 %s21, %s28
      %s35 = sor.u32 %s33, %s34
      %p36 = scmp.eq.s32.totalorder %s35, 0
      %s38 = sadd.s32 %s37, 1
      %s39 = scalar_select %p36, %s37, %s38
      %p42 = pneg %p36
      %p43 = scmp.eq.s32.totalorder %s13, 63
      %p44 = por %p42, %p43
      %p45 = scmp.ne.s32.totalorder %s37, %s40
      %p46 = scmp.eq.s32.totalorder %s13, 0
      %p47 = por %p45, %p46
      %p48 = scmp.ne.s32.totalorder %s37, %s40
      %p49 = scmp.eq.s32.totalorder %s18, 63
      %p50 = por %p48, %p49
      %p51 = scmp.ne.s32.totalorder %s40, %s41
      %p52 = scmp.eq.s32.totalorder %s18, 0
      %p53 = por %p51, %p52
      %p54 = scmp.ne.s32.totalorder %s40, %s41
      %p55 = scmp.eq.s32.totalorder %s19, 63
      %p56 = por %p54, %p55
      %p58 = scmp.ne.s32.totalorder %s41, %s57
      %p59 = scmp.eq.s32.totalorder %s19, 0
      %p60 = por %p58, %p59
      %s62 = sadd.s32 %s61, 1
      %p65 = scmp.eq.s32.totalorder %s13, 63
      %p66 = scmp.ne.s32.totalorder %s61, %s63
      %p67 = scmp.eq.s32.totalorder %s13, 0
      %p68 = por %p66, %p67
      %p69 = scmp.ne.s32.totalorder %s61, %s63
      %p70 = scmp.eq.s32.totalorder %s18, 63
      %p71 = por %p69, %p70
      %p72 = scmp.ne.s32.totalorder %s63, %s64
      %p73 = scmp.eq.s32.totalorder %s18, 0
      %p74 = por %p72, %p73
      %p75 = scmp.ne.s32.totalorder %s63, %s64
      %p76 = scmp.eq.s32.totalorder %s19, 63
      %p77 = por %p75, %p76
      %p79 = scmp.ne.s32.totalorder %s64, %s78
      %p80 = scmp.eq.s32.totalorder %s19, 0
      %p81 = por %p79, %p80
      %s83 = sadd.s32 %s82, 1
      %p86 = scmp.eq.s32.totalorder %s13, 63
      %p87 = scmp.ne.s32.totalorder %s82, %s84
      %p88 = scmp.eq.s32.totalorder %s13, 0
      %p89 = por %p87, %p88
      %p90 = scmp.ne.s32.totalorder %s82, %s84
      %p91 = scmp.eq.s32.totalorder %s18, 63
      %p92 = por %p90, %p91
      %p93 = scmp.ne.s32.totalorder %s84, %s85
      %p94 = scmp.eq.s32.totalorder %s18, 0
      %p95 = por %p93, %p94
      %p96 = scmp.ne.s32.totalorder %s84, %s85
      %p97 = scmp.eq.s32.totalorder %s19, 63
      %p98 = por %p96, %p97
      %p100 = scmp.ne.s32.totalorder %s85, %s99
      %p101 = scmp.eq.s32.totalorder %s19, 0
      %p102 = por %p100, %p101
      %s104 = sadd.s32 %s103, 1
      %p107 = scmp.eq.s32.totalorder %s13, 63
      %p108 = scmp.ne.s32.totalorder %s103, %s105
      %p109 = scmp.eq.s32.totalorder %s13, 0
      %p110 = por %p108, %p109
      %p111 = scmp.ne.s32.totalorder %s103, %s105
      %p112 = scmp.eq.s32.totalorder %s18, 63
      %p113 = por %p111, %p112
      %p114 = scmp.ne.s32.totalorder %s105, %s106
      %p115 = scmp.eq.s32.totalorder %s18, 0
      %p116 = por %p114, %p115
      %p117 = scmp.ne.s32.totalorder %s105, %s106
      %p118 = scmp.eq.s32.totalorder %s19, 63
      %p119 = por %p117, %p118
      %p121 = scmp.ne.s32.totalorder %s106, %s120
      %p122 = scmp.eq.s32.totalorder %s19, 0
      %p123 = por %p121, %p122
      %s124 = ssub.s32 %s20, %s32
      %s125 = ssub.s32 %s21, %s28
      %s126 = sor.u32 %s124, %s125
      %p127 = scmp.eq.s32.totalorder %s126, 0
      %s129 = sadd.s32 %s128, 1
      %s130 = scalar_select %p127, %s128, %s129
      %p133 = pneg %p127
      %p134 = scmp.eq.s32.totalorder %s13, 63
      %p135 = por %p133, %p134
      %p136 = scmp.ne.s32.totalorder %s128, %s131
      %p137 = scmp.eq.s32.totalorder %s13, 0
      %p138 = por %p136, %p137
      %p139 = scmp.ne.s32.totalorder %s128, %s131
      %p140 = scmp.eq.s32.totalorder %s18, 63
      %p141 = por %p139, %p140
      %p142 = scmp.ne.s32.totalorder %s131, %s132
      %p143 = scmp.eq.s32.totalorder %s18, 0
      %p144 = por %p142, %p143
      %p145 = scmp.ne.s32.totalorder %s131, %s132
      %p146 = scmp.eq.s32.totalorder %s19, 63
      %p147 = por %p145, %p146
      %p149 = scmp.ne.s32.totalorder %s132, %s148
      %p150 = scmp.eq.s32.totalorder %s19, 0
      %p151 = por %p149, %p150
      %p152 = scmp.le.s32.totalorder 1, %s13
      %p153 = scmp.lt.s32.totalorder %s13, 65
      %p154 = pnand %p152, %p153
      %p155 = pneg %p154
      // Predicated region
      $region9: #{tpu_custom_call.1} parent=5 // pred_check
        _
      $region10: #{tpu_custom_call.1} parent=5 // pred_check_branch
        %157 = sbr.rel (%p154) target = $region12
      $region11: #{tpu_custom_call.1} parent=5 // pred_region
        %s158 = ssub.s32 %s13, 1
        // Predicated region
        $region13: #{tpu_custom_call.1} parent=11 // pred_check
          %p159 = pneg %p74
        $region14: #{tpu_custom_call.1} parent=11 // pred_check_branch
          %161 = sbr.rel (%p159) target = $region16
        $region15: #{tpu_custom_call.1} parent=11 // pred_region
          _
        $region16: #{tpu_custom_call.1} parent=11 // pred_fallthru
          _
        // Predicated region
        $region17: #{tpu_custom_call.1} parent=11 // pred_check
          %p162 = pneg %p95
        $region18: #{tpu_custom_call.1} parent=11 // pred_check_branch
          %164 = sbr.rel (%p162) target = $region20
        $region19: #{tpu_custom_call.1} parent=11 // pred_region
          _
        $region20: #{tpu_custom_call.1} parent=11 // pred_fallthru
          _
        // Predicated region
        $region21: #{tpu_custom_call.1} parent=11 // pred_check
          %p165 = pneg %p116
        $region22: #{tpu_custom_call.1} parent=11 // pred_check_branch
          %167 = sbr.rel (%p165) target = $region24
        $region23: #{tpu_custom_call.1} parent=11 // pred_region
          _
        $region24: #{tpu_custom_call.1} parent=11 // pred_fallthru
          _
      $region12: #{tpu_custom_call.1} parent=5 // pred_fallthru
        _
      %p168 = scmp.lt.s32.totalorder %s13, 64
      // Predicated region
      $region25: #{tpu_custom_call.1} parent=5 // pred_check
        %p169 = pneg %p168
      $region26: #{tpu_custom_call.1} parent=5 // pred_check_branch
        %171 = sbr.rel (%p169) target = $region28
      $region27: #{tpu_custom_call.1} parent=5 // pred_region
        // Predicated region
        $region29: #{tpu_custom_call.1} parent=27 // pred_check
          %p172 = pneg %p47
        $region30: #{tpu_custom_call.1} parent=27 // pred_check_branch
          %174 = sbr.rel (%p172) target = $region32
        $region31: #{tpu_custom_call.1} parent=27 // pred_region
          %s175 = sand.u32 %s37, 1
          %s176 = sand.u32 %s37, 1
          %s177 = smul.addr %s176, 256
          %s178 = scalar_lea.vmem [#allocation2], %s177
          %s179 = smul.u32 8, %s21
          %s180 = smul.addr %s20, 1024
          %s181 = sadd.s32 %s179, %s180
          %s182 = smul.addr %s181, 8
          %s183 = scalar_lea.vmem %s0, %s182
          // Predicated region
          $region33: #{tpu_custom_call.1} parent=31 // pred_check
            _
          $region34: #{tpu_custom_call.1} parent=31 // pred_check_branch
            %185 = sbr.rel (0) target = $region36
          $region35: #{tpu_custom_call.1} parent=31 // pred_region
            // Predicated region
            $region37: #{tpu_custom_call.1} parent=35 // pred_check
              _
            $region38: #{tpu_custom_call.1} parent=35 // pred_check_branch
              %187 = sbr.rel (0) target = $region40
            $region39: #{tpu_custom_call.1} parent=35 // pred_region
              loop: start=0, step=1, limit=1
              $region41: #{tpu_custom_call.1} parent=39 // loop_pre_header
                _
              $region42: #{tpu_custom_call.1} parent=39 // loop_header
                %s189 = sphi 0, %s193
                %p190 = scmp.ge.s32.totalorder %s189, 1
                %s194 = sphi %s183, %s183
                %s195 = sphi %s178, %s178
              $region43: #{tpu_custom_call.1} parent=39 // loop_header_branch
                %192 = sbr.rel (%p190) target = $region47
              $region44: #{tpu_custom_call.1} parent=39 // loop_body
                %v196 = vld [vmem:[%s194] sm:$0xff]
                %197 = vst [vmem:[%s195] sm:$0xff] %v196
                %v198 = vld [vmem:[%s194 + $0x8] sm:$0xff]
                %199 = vst [vmem:[%s195 + $0x8] sm:$0xff] %v198
                %v200 = vld [vmem:[%s194 + $0x10] sm:$0xff]
                %201 = vst [vmem:[%s195 + $0x10] sm:$0xff] %v200
                %v202 = vld [vmem:[%s194 + $0x18] sm:$0xff]
                %203 = vst [vmem:[%s195 + $0x18] sm:$0xff] %v202
                %v204 = vld [vmem:[%s194 + $0x20] sm:$0xff]
                %205 = vst [vmem:[%s195 + $0x20] sm:$0xff] %v204
                %v206 = vld [vmem:[%s194 + $0x28] sm:$0xff]
                %207 = vst [vmem:[%s195 + $0x28] sm:$0xff] %v206
                %v208 = vld [vmem:[%s194 + $0x30] sm:$0xff]
                %209 = vst [vmem:[%s195 + $0x30] sm:$0xff] %v208
                %v210 = vld [vmem:[%s194 + $0x38] sm:$0xff]
                %211 = vst [vmem:[%s195 + $0x38] sm:$0xff] %v210
                %v212 = vld [vmem:[%s194 + $0x800] sm:$0xff]
                %213 = vst [vmem:[%s195 + $0x40] sm:$0xff] %v212
                %v214 = vld [vmem:[%s194 + $0x808] sm:$0xff]
                %215 = vst [vmem:[%s195 + $0x48] sm:$0xff] %v214
                %v216 = vld [vmem:[%s194 + $0x810] sm:$0xff]
                %217 = vst [vmem:[%s195 + $0x50] sm:$0xff] %v216
                %v218 = vld [vmem:[%s194 + $0x818] sm:$0xff]
                %219 = vst [vmem:[%s195 + $0x58] sm:$0xff] %v218
                %v220 = vld [vmem:[%s194 + $0x820] sm:$0xff]
                %221 = vst [vmem:[%s195 + $0x60] sm:$0xff] %v220
                %v222 = vld [vmem:[%s194 + $0x828] sm:$0xff]
                %223 = vst [vmem:[%s195 + $0x68] sm:$0xff] %v222
                %v224 = vld [vmem:[%s194 + $0x830] sm:$0xff]
                %225 = vst [vmem:[%s195 + $0x70] sm:$0xff] %v224
                %v226 = vld [vmem:[%s194 + $0x838] sm:$0xff]
                %227 = vst [vmem:[%s195 + $0x78] sm:$0xff] %v226
                %v228 = vld [vmem:[%s194 + $0x1000] sm:$0xff]
                %229 = vst [vmem:[%s195 + $0x80] sm:$0xff] %v228
                %v230 = vld [vmem:[%s194 + $0x1008] sm:$0xff]
                %231 = vst [vmem:[%s195 + $0x88] sm:$0xff] %v230
                %v232 = vld [vmem:[%s194 + $0x1010] sm:$0xff]
                %233 = vst [vmem:[%s195 + $0x90] sm:$0xff] %v232
                %v234 = vld [vmem:[%s194 + $0x1018] sm:$0xff]
                %235 = vst [vmem:[%s195 + $0x98] sm:$0xff] %v234
                %v236 = vld [vmem:[%s194 + $0x1020] sm:$0xff]
                %237 = vst [vmem:[%s195 + $0xa0] sm:$0xff] %v236
                %v238 = vld [vmem:[%s194 + $0x1028] sm:$0xff]
                %239 = vst [vmem:[%s195 + $0xa8] sm:$0xff] %v238
                %v240 = vld [vmem:[%s194 + $0x1030] sm:$0xff]
                %241 = vst [vmem:[%s195 + $0xb0] sm:$0xff] %v240
                %v242 = vld [vmem:[%s194 + $0x1038] sm:$0xff]
                %243 = vst [vmem:[%s195 + $0xb8] sm:$0xff] %v242
                %v244 = vld [vmem:[%s194 + $0x1800] sm:$0xff]
                %245 = vst [vmem:[%s195 + $0xc0] sm:$0xff] %v244
                %v246 = vld [vmem:[%s194 + $0x1808] sm:$0xff]
                %247 = vst [vmem:[%s195 + $0xc8] sm:$0xff] %v246
                %v248 = vld [vmem:[%s194 + $0x1810] sm:$0xff]
                %249 = vst [vmem:[%s195 + $0xd0] sm:$0xff] %v248
                %v250 = vld [vmem:[%s194 + $0x1818] sm:$0xff]
                %251 = vst [vmem:[%s195 + $0xd8] sm:$0xff] %v250
                %v252 = vld [vmem:[%s194 + $0x1820] sm:$0xff]
                %253 = vst [vmem:[%s195 + $0xe0] sm:$0xff] %v252
                %v254 = vld [vmem:[%s194 + $0x1828] sm:$0xff]
                %255 = vst [vmem:[%s195 + $0xe8] sm:$0xff] %v254
                %v256 = vld [vmem:[%s194 + $0x1830] sm:$0xff]
                %257 = vst [vmem:[%s195 + $0xf0] sm:$0xff] %v256
                %v258 = vld [vmem:[%s194 + $0x1838] sm:$0xff]
                %259 = vst [vmem:[%s195 + $0xf8] sm:$0xff] %v258
              $region45: #{tpu_custom_call.1} parent=39 // loop_footer
                %s193 = sadd.s32 1, %s189
              $region46: #{tpu_custom_call.1} parent=39 // loop_footer_branch
                %188 = sbr.rel target = $region42
              $region47: #{tpu_custom_call.1} parent=39 // loop_exit
                _
            $region40: #{tpu_custom_call.1} parent=35 // pred_fallthru
              _
            // Predicated region
            $region48: #{tpu_custom_call.1} parent=35 // pred_check
              _
            $region49: #{tpu_custom_call.1} parent=35 // pred_check_branch
              %261 = sbr.rel target = $region51
            $region50: #{tpu_custom_call.1} parent=35 // pred_region
              _
            $region51: #{tpu_custom_call.1} parent=35 // pred_fallthru
              _
          $region36: #{tpu_custom_call.1} parent=31 // pred_fallthru
            _
          %262 = vnop
        $region32: #{tpu_custom_call.1} parent=27 // pred_fallthru
          _
      $region28: #{tpu_custom_call.1} parent=5 // pred_fallthru
        _
      %p263 = scmp.le.s32.totalorder 1, %s13
      %p264 = scmp.lt.s32.totalorder %s13, 65
      %p265 = pnand %p263, %p264
      %p266 = pneg %p265
      // Predicated region
      $region52: #{tpu_custom_call.1} parent=5 // pred_check
        _
      $region53: #{tpu_custom_call.1} parent=5 // pred_check_branch
        %268 = sbr.rel (%p265) target = $region55
      $region54: #{tpu_custom_call.1} parent=5 // pred_region
        %s269 = ssub.s32 %s13, 1
        %s270 = sand.u32 %s40, 1
        %s271 = sand.u32 %s40, 1
        %s272 = smul.addr %s271, 256
        %s273 = scalar_lea.vmem [#allocation2], %s272
        // Predicated region
        $region56: #{tpu_custom_call.1} parent=54 // pred_check
          %p274 = pneg %p53
        $region57: #{tpu_custom_call.1} parent=54 // pred_check_branch
          %276 = sbr.rel (%p274) target = $region59
        $region58: #{tpu_custom_call.1} parent=54 // pred_region
          _
        $region59: #{tpu_custom_call.1} parent=54 // pred_fallthru
          _
        %s277 = sand.u32 %s40, 1
        %s278 = sand.u32 %s40, 1
        %s279 = smul.addr %s278, 256
        %s280 = scalar_lea.vmem [#allocation2], %s279
        %p281 = pneg %p53
        %p282 = pneg %p50
        %p283 = pneg %p74
        %p284 = pneg %p71
        %p285 = pneg %p95
        %p286 = pneg %p92
        %p287 = pneg %p116
        %p288 = pneg %p113
        %p289 = pneg %p144
        %p290 = pneg %p141
        %s291 = sand.u32 %s131, 1
        %s292 = scalar_lea.sflag [#allocation4], %s291
        %s293 = sand.u32 %s131, 1
        %s294 = smul.addr %s293, 256
        %s295 = scalar_lea.vmem [#allocation3], %s294
        %s296 = smul.u32 8, %s23
        %s297 = smul.u32 8, %s23
        %v298 = vld [vmem:[%s273] sm:$0xff]
        %v299 = vld [vmem:[%s273 + $0x8] sm:$0xff]
        %v300 = vld [vmem:[%s273 + $0x10] sm:$0xff]
        %v301 = vld [vmem:[%s273 + $0x18] sm:$0xff]
        %v302 = vld [vmem:[%s273 + $0x20] sm:$0xff]
        %v303 = vld [vmem:[%s273 + $0x28] sm:$0xff]
        %v304 = vld [vmem:[%s273 + $0x30] sm:$0xff]
        %v305 = vld [vmem:[%s273 + $0x38] sm:$0xff]
        %v306 = vld [vmem:[%s273 + $0x40] sm:$0xff]
        %v307 = vld [vmem:[%s273 + $0x48] sm:$0xff]
        %v308 = vld [vmem:[%s273 + $0x50] sm:$0xff]
        %v309 = vld [vmem:[%s273 + $0x58] sm:$0xff]
        %v310 = vld [vmem:[%s273 + $0x60] sm:$0xff]
        %v311 = vld [vmem:[%s273 + $0x68] sm:$0xff]
        %v312 = vld [vmem:[%s273 + $0x70] sm:$0xff]
        %v313 = vld [vmem:[%s273 + $0x78] sm:$0xff]
        %v314 = vld [vmem:[%s273 + $0x80] sm:$0xff]
        %v315 = vld [vmem:[%s273 + $0x88] sm:$0xff]
        %v316 = vld [vmem:[%s273 + $0x90] sm:$0xff]
        %v317 = vld [vmem:[%s273 + $0x98] sm:$0xff]
        %v318 = vld [vmem:[%s273 + $0xa0] sm:$0xff]
        %v319 = vld [vmem:[%s273 + $0xa8] sm:$0xff]
        %v320 = vld [vmem:[%s273 + $0xb0] sm:$0xff]
        %v321 = vld [vmem:[%s273 + $0xb8] sm:$0xff]
        %v322 = vld [vmem:[%s273 + $0xc0] sm:$0x7]
        %v323 = vld [vmem:[%s273 + $0xc8] sm:$0x7]
        %v324 = vld [vmem:[%s273 + $0xd0] sm:$0x7]
        %v325 = vld [vmem:[%s273 + $0xd8] sm:$0x7]
        %v326 = vld [vmem:[%s273 + $0xe0] sm:$0x7]
        %v327 = vld [vmem:[%s273 + $0xe8] sm:$0x7]
        %v328 = vld [vmem:[%s273 + $0xf0] sm:$0x7]
        %v329 = vld [vmem:[%s273 + $0xf8] sm:$0x7]
        %v330 = vld [vmem:[%s1] sm:$0xff]
        %v331 = vld [vmem:[%s1 + $0x8] sm:$0xff]
        %v332 = vld [vmem:[%s1 + $0x10] sm:$0xff]
        %v333 = vld [vmem:[%s1 + $0x18] sm:$0xff]
        %vm334 = vcmask 220160
        %v336 = vsel %vm334, %v330, 0
        %v339 = vsel %vm334, %v331, 0
        %v342 = vsel %vm334, %v332, 0
        %v345 = vsel %vm334, %v333, 0
        %vm347 = vcmask 1042432
        %v349 = vsel %vm347, %v322, 0
        %v352 = vsel %vm347, %v323, 0
        %v355 = vsel %vm347, %v324, 0
        %v358 = vsel %vm347, %v325, 0
        %v361 = vsel %vm347, %v326, 0
        %v364 = vsel %vm347, %v327, 0
        %v367 = vsel %vm347, %v328, 0
        %v370 = vsel %vm347, %v329, 0
        %372 = vmatprep.subr.mxu0 0.0
        %373 = vmatpush1.msra.mxu0 0.0
        %374 = vmatprep.subr.mxu0 0.0
        %375 = vmatpush1.msra.mxu0 0.0
        %376 = vmatprep.subr.mxu0 0.0
        %377 = vmatpush1.msra.mxu0 0.0
        %378 = vmatprep.subr.mxu0 0.0
        %379 = vmatpush1.msra.mxu0 0.0
        %380 = vmatprep.subr.mxu0 0.0
        %381 = vmatpush1.msra.mxu0 0.0
        %382 = vmatprep.subr.mxu0 0.0
        %383 = vmatpush1.msra.mxu0 0.0
        %384 = vmatprep.subr.mxu0 0.0
        %385 = vmatpush1.msra.mxu0 0.0
        %386 = vmatprep.subr.mxu0 0.0
        %387 = vmatpush1.msra.mxu0 0.0
        %388 = vmatprep.subr.mxu0 0.0
        %389 = vmatpush1.msra.mxu0 0.0
        %390 = vmatprep.subr.mxu0 0.0
        %391 = vmatpush1.msra.mxu0 0.0
        %392 = vmatprep.subr.mxu0 0.0
        %393 = vmatpush1.msra.mxu0 0.0
        %394 = vmatprep.subr.mxu0 0.0
        %395 = vmatpush1.msra.mxu0 0.0
        %396 = vmatprep.subr.mxu0 %v352
        %397 = vmatpush1.msra.mxu0 %v349
        %398 = vmatprep.subr.mxu0 %v315
        %399 = vmatpush1.msra.mxu0 %v314
        %400 = vmatprep.subr.mxu0 %v307
        %401 = vmatpush1.msra.mxu0 %v306
        %402 = vmatprep.subr.mxu0 %v299
        %403 = vmatpush1.msra.mxu0 %v298
        %404 = vmatprep.subr.mxu0 0.0
        %405 = vmatpush2.msra.mxu0 0.0
        %406 = vmatprep.subr.mxu0 0.0
        %407 = vmatpush2.msra.mxu0 0.0
        %408 = vmatprep.subr.mxu0 0.0
        %409 = vmatpush2.msra.mxu0 0.0
        %410 = vmatprep.subr.mxu0 0.0
        %411 = vmatpush2.msra.mxu0 0.0
        %412 = vmatprep.subr.mxu0 0.0
        %413 = vmatpush2.msra.mxu0 0.0
        %414 = vmatprep.subr.mxu0 0.0
        %415 = vmatpush2.msra.mxu0 0.0
        %416 = vmatprep.subr.mxu0 0.0
        %417 = vmatpush2.msra.mxu0 0.0
        %418 = vmatprep.subr.mxu0 0.0
        %419 = vmatpush2.msra.mxu0 0.0
        %420 = vmatprep.subr.mxu0 0.0
        %421 = vmatpush2.msra.mxu0 0.0
        %422 = vmatprep.subr.mxu0 0.0
        %423 = vmatpush2.msra.mxu0 0.0
        %424 = vmatprep.subr.mxu0 0.0
        %425 = vmatpush2.msra.mxu0 0.0
        %426 = vmatprep.subr.mxu0 0.0
        %427 = vmatpush2.msra.mxu0 0.0
        %428 = vmatprep.subr.mxu0 0.0
        %429 = vmatpush2.msra.mxu0 0.0
        %430 = vmatprep.subr.mxu0 0.0
        %431 = vmatpush2.msra.mxu0 0.0
        %432 = vmatprep.subr.mxu0 0.0
        %433 = vmatpush2.msra.mxu0 0.0
        %434 = vmatprep.subr.mxu0 0.0
        %435 = vmatpush2.msra.mxu0 0.0
        %436 = vmatprep.mubr.f32.mxu0 0.0
        %437 = vmatmul.mubr.f32.gmra.mxu0 %v336
        %v438 = vpop.f32.mrf.mxu0
        %v439 = vadd.f32 0.0, %v438
        %v440 = vpop.f32.mrf.mxu0
        %v441 = vadd.f32 0.0, %v440
        %442 = vmatprep.mubr.f32.mxu0 0.0
        %443 = vmatmul.mubr.f32.gmra.mxu0 %v339
        %v444 = vpop.f32.mrf.mxu0
        %v445 = vadd.f32 0.0, %v444
        %v446 = vpop.f32.mrf.mxu0
        %v447 = vadd.f32 0.0, %v446
        %448 = vmatprep.mubr.f32.mxu0 0.0
        %449 = vmatmul.mubr.f32.gmra.mxu0 %v342
        %v450 = vpop.f32.mrf.mxu0
        %v451 = vadd.f32 0.0, %v450
        %v452 = vpop.f32.mrf.mxu0
        %v453 = vadd.f32 0.0, %v452
        %454 = vmatprep.mubr.f32.mxu0 0.0
        %455 = vmatmul.mubr.f32.gmra.mxu0 %v345
        %v456 = vpop.f32.mrf.mxu0
        %v457 = vadd.f32 0.0, %v456
        %v458 = vpop.f32.mrf.mxu0
        %v459 = vadd.f32 0.0, %v458
        %460 = vdwg.mxu0
        %461 = vmatprep.subr.mxu0 0.0
        %462 = vmatpush1.msra.mxu0 0.0
        %463 = vmatprep.subr.mxu0 0.0
        %464 = vmatpush1.msra.mxu0 0.0
        %465 = vmatprep.subr.mxu0 0.0
        %466 = vmatpush1.msra.mxu0 0.0
        %467 = vmatprep.subr.mxu0 0.0
        %468 = vmatpush1.msra.mxu0 0.0
        %469 = vmatprep.subr.mxu0 0.0
        %470 = vmatpush1.msra.mxu0 0.0
        %471 = vmatprep.subr.mxu0 0.0
        %472 = vmatpush1.msra.mxu0 0.0
        %473 = vmatprep.subr.mxu0 0.0
        %474 = vmatpush1.msra.mxu0 0.0
        %475 = vmatprep.subr.mxu0 0.0
        %476 = vmatpush1.msra.mxu0 0.0
        %477 = vmatprep.subr.mxu0 0.0
        %478 = vmatpush1.msra.mxu0 0.0
        %479 = vmatprep.subr.mxu0 0.0
        %480 = vmatpush1.msra.mxu0 0.0
        %481 = vmatprep.subr.mxu0 0.0
        %482 = vmatpush1.msra.mxu0 0.0
        %483 = vmatprep.subr.mxu0 0.0
        %484 = vmatpush1.msra.mxu0 0.0
        %485 = vmatprep.subr.mxu0 %v358
        %486 = vmatpush1.msra.mxu0 %v355
        %487 = vmatprep.subr.mxu0 %v317
        %488 = vmatpush1.msra.mxu0 %v316
        %489 = vmatprep.subr.mxu0 %v309
        %490 = vmatpush1.msra.mxu0 %v308
        %491 = vmatprep.subr.mxu0 %v301
        %492 = vmatpush1.msra.mxu0 %v300
        %493 = vmatprep.subr.mxu0 0.0
        %494 = vmatpush2.msra.mxu0 0.0
        %495 = vmatprep.subr.mxu0 0.0
        %496 = vmatpush2.msra.mxu0 0.0
        %497 = vmatprep.subr.mxu0 0.0
        %498 = vmatpush2.msra.mxu0 0.0
        %499 = vmatprep.subr.mxu0 0.0
        %500 = vmatpush2.msra.mxu0 0.0
        %501 = vmatprep.subr.mxu0 0.0
        %502 = vmatpush2.msra.mxu0 0.0
        %503 = vmatprep.subr.mxu0 0.0
        %504 = vmatpush2.msra.mxu0 0.0
        %505 = vmatprep.subr.mxu0 0.0
        %506 = vmatpush2.msra.mxu0 0.0
        %507 = vmatprep.subr.mxu0 0.0
        %508 = vmatpush2.msra.mxu0 0.0
        %509 = vmatprep.subr.mxu0 0.0
        %510 = vmatpush2.msra.mxu0 0.0
        %511 = vmatprep.subr.mxu0 0.0
        %512 = vmatpush2.msra.mxu0 0.0
        %513 = vmatprep.subr.mxu0 0.0
        %514 = vmatpush2.msra.mxu0 0.0
        %515 = vmatprep.subr.mxu0 0.0
        %516 = vmatpush2.msra.mxu0 0.0
        %517 = vmatprep.subr.mxu0 0.0
        %518 = vmatpush2.msra.mxu0 0.0
        %519 = vmatprep.subr.mxu0 0.0
        %520 = vmatpush2.msra.mxu0 0.0
        %521 = vmatprep.subr.mxu0 0.0
        %522 = vmatpush2.msra.mxu0 0.0
        %523 = vmatprep.subr.mxu0 0.0
        %524 = vmatpush2.msra.mxu0 0.0
        %525 = vmatprep.mubr.f32.mxu0 0.0
        %526 = vmatmul.mubr.f32.gmra.mxu0 %v336
        %v527 = vpop.f32.mrf.mxu0
        %v528 = vadd.f32 0.0, %v527
        %v529 = vpop.f32.mrf.mxu0
        %v530 = vadd.f32 0.0, %v529
        %531 = vmatprep.mubr.f32.mxu0 0.0
        %532 = vmatmul.mubr.f32.gmra.mxu0 %v339
        %v533 = vpop.f32.mrf.mxu0
        %v534 = vadd.f32 0.0, %v533
        %v535 = vpop.f32.mrf.mxu0
        %v536 = vadd.f32 0.0, %v535
        %537 = vmatprep.mubr.f32.mxu0 0.0
        %538 = vmatmul.mubr.f32.gmra.mxu0 %v342
        %v539 = vpop.f32.mrf.mxu0
        %v540 = vadd.f32 0.0, %v539
        %v541 = vpop.f32.mrf.mxu0
        %v542 = vadd.f32 0.0, %v541
        %543 = vmatprep.mubr.f32.mxu0 0.0
        %544 = vmatmul.mubr.f32.gmra.mxu0 %v345
        %v545 = vpop.f32.mrf.mxu0
        %v546 = vadd.f32 0.0, %v545
        %v547 = vpop.f32.mrf.mxu0
        %v548 = vadd.f32 0.0, %v547
        %549 = vdwg.mxu0
        %550 = vmatprep.subr.mxu0 0.0
        %551 = vmatpush1.msra.mxu0 0.0
        %552 = vmatprep.subr.mxu0 0.0
        %553 = vmatpush1.msra.mxu0 0.0
        %554 = vmatprep.subr.mxu0 0.0
        %555 = vmatpush1.msra.mxu0 0.0
        %556 = vmatprep.subr.mxu0 0.0
        %557 = vmatpush1.msra.mxu0 0.0
        %558 = vmatprep.subr.mxu0 0.0
        %559 = vmatpush1.msra.mxu0 0.0
        %560 = vmatprep.subr.mxu0 0.0
        %561 = vmatpush1.msra.mxu0 0.0
        %562 = vmatprep.subr.mxu0 0.0
        %563 = vmatpush1.msra.mxu0 0.0
        %564 = vmatprep.subr.mxu0 0.0
        %565 = vmatpush1.msra.mxu0 0.0
        %566 = vmatprep.subr.mxu0 0.0
        %567 = vmatpush1.msra.mxu0 0.0
        %568 = vmatprep.subr.mxu0 0.0
        %569 = vmatpush1.msra.mxu0 0.0
        %570 = vmatprep.subr.mxu0 0.0
        %571 = vmatpush1.msra.mxu0 0.0
        %572 = vmatprep.subr.mxu0 0.0
        %573 = vmatpush1.msra.mxu0 0.0
        %574 = vmatprep.subr.mxu0 %v364
        %575 = vmatpush1.msra.mxu0 %v361
        %576 = vmatprep.subr.mxu0 %v319
        %577 = vmatpush1.msra.mxu0 %v318
        %578 = vmatprep.subr.mxu0 %v311
        %579 = vmatpush1.msra.mxu0 %v310
        %580 = vmatprep.subr.mxu0 %v303
        %581 = vmatpush1.msra.mxu0 %v302
        %582 = vmatprep.subr.mxu0 0.0
        %583 = vmatpush2.msra.mxu0 0.0
        %584 = vmatprep.subr.mxu0 0.0
        %585 = vmatpush2.msra.mxu0 0.0
        %586 = vmatprep.subr.mxu0 0.0
        %587 = vmatpush2.msra.mxu0 0.0
        %588 = vmatprep.subr.mxu0 0.0
        %589 = vmatpush2.msra.mxu0 0.0
        %590 = vmatprep.subr.mxu0 0.0
        %591 = vmatpush2.msra.mxu0 0.0
        %592 = vmatprep.subr.mxu0 0.0
        %593 = vmatpush2.msra.mxu0 0.0
        %594 = vmatprep.subr.mxu0 0.0
        %595 = vmatpush2.msra.mxu0 0.0
        %596 = vmatprep.subr.mxu0 0.0
        %597 = vmatpush2.msra.mxu0 0.0
        %598 = vmatprep.subr.mxu0 0.0
        %599 = vmatpush2.msra.mxu0 0.0
        %600 = vmatprep.subr.mxu0 0.0
        %601 = vmatpush2.msra.mxu0 0.0
        %602 = vmatprep.subr.mxu0 0.0
        %603 = vmatpush2.msra.mxu0 0.0
        %604 = vmatprep.subr.mxu0 0.0
        %605 = vmatpush2.msra.mxu0 0.0
        %606 = vmatprep.subr.mxu0 0.0
        %607 = vmatpush2.msra.mxu0 0.0
        %608 = vmatprep.subr.mxu0 0.0
        %609 = vmatpush2.msra.mxu0 0.0
        %610 = vmatprep.subr.mxu0 0.0
        %611 = vmatpush2.msra.mxu0 0.0
        %612 = vmatprep.subr.mxu0 0.0
        %613 = vmatpush2.msra.mxu0 0.0
        %614 = vmatprep.mubr.f32.mxu0 0.0
        %615 = vmatmul.mubr.f32.gmra.mxu0 %v336
        %v616 = vpop.f32.mrf.mxu0
        %v617 = vadd.f32 0.0, %v616
        %v618 = vpop.f32.mrf.mxu0
        %v619 = vadd.f32 0.0, %v618
        %620 = vmatprep.mubr.f32.mxu0 0.0
        %621 = vmatmul.mubr.f32.gmra.mxu0 %v339
        %v622 = vpop.f32.mrf.mxu0
        %v623 = vadd.f32 0.0, %v622
        %v624 = vpop.f32.mrf.mxu0
        %v625 = vadd.f32 0.0, %v624
        %626 = vmatprep.mubr.f32.mxu0 0.0
        %627 = vmatmul.mubr.f32.gmra.mxu0 %v342
        %v628 = vpop.f32.mrf.mxu0
        %v629 = vadd.f32 0.0, %v628
        %v630 = vpop.f32.mrf.mxu0
        %v631 = vadd.f32 0.0, %v630
        %632 = vmatprep.mubr.f32.mxu0 0.0
        %633 = vmatmul.mubr.f32.gmra.mxu0 %v345
        %v634 = vpop.f32.mrf.mxu0
        %v635 = vadd.f32 0.0, %v634
        %v636 = vpop.f32.mrf.mxu0
        %v637 = vadd.f32 0.0, %v636
        %638 = vdwg.mxu0
        %639 = vmatprep.subr.mxu0 0.0
        %640 = vmatpush1.msra.mxu0 0.0
        %641 = vmatprep.subr.mxu0 0.0
        %642 = vmatpush1.msra.mxu0 0.0
        %643 = vmatprep.subr.mxu0 0.0
        %644 = vmatpush1.msra.mxu0 0.0
        %645 = vmatprep.subr.mxu0 0.0
        %646 = vmatpush1.msra.mxu0 0.0
        %647 = vmatprep.subr.mxu0 0.0
        %648 = vmatpush1.msra.mxu0 0.0
        %649 = vmatprep.subr.mxu0 0.0
        %650 = vmatpush1.msra.mxu0 0.0
        %651 = vmatprep.subr.mxu0 0.0
        %652 = vmatpush1.msra.mxu0 0.0
        %653 = vmatprep.subr.mxu0 0.0
        %654 = vmatpush1.msra.mxu0 0.0
        %655 = vmatprep.subr.mxu0 0.0
        %656 = vmatpush1.msra.mxu0 0.0
        %657 = vmatprep.subr.mxu0 0.0
        %658 = vmatpush1.msra.mxu0 0.0
        %659 = vmatprep.subr.mxu0 0.0
        %660 = vmatpush1.msra.mxu0 0.0
        %661 = vmatprep.subr.mxu0 0.0
        %662 = vmatpush1.msra.mxu0 0.0
        %663 = vmatprep.subr.mxu0 %v370
        %664 = vmatpush1.msra.mxu0 %v367
        %665 = vmatprep.subr.mxu0 %v321
        %666 = vmatpush1.msra.mxu0 %v320
        %667 = vmatprep.subr.mxu0 %v313
        %668 = vmatpush1.msra.mxu0 %v312
        %669 = vmatprep.subr.mxu0 %v305
        %670 = vmatpush1.msra.mxu0 %v304
        %671 = vmatprep.subr.mxu0 0.0
        %672 = vmatpush2.msra.mxu0 0.0
        %673 = vmatprep.subr.mxu0 0.0
        %674 = vmatpush2.msra.mxu0 0.0
        %675 = vmatprep.subr.mxu0 0.0
        %676 = vmatpush2.msra.mxu0 0.0
        %677 = vmatprep.subr.mxu0 0.0
        %678 = vmatpush2.msra.mxu0 0.0
        %679 = vmatprep.subr.mxu0 0.0
        %680 = vmatpush2.msra.mxu0 0.0
        %681 = vmatprep.subr.mxu0 0.0
        %682 = vmatpush2.msra.mxu0 0.0
        %683 = vmatprep.subr.mxu0 0.0
        %684 = vmatpush2.msra.mxu0 0.0
        %685 = vmatprep.subr.mxu0 0.0
        %686 = vmatpush2.msra.mxu0 0.0
        %687 = vmatprep.subr.mxu0 0.0
        %688 = vmatpush2.msra.mxu0 0.0
        %689 = vmatprep.subr.mxu0 0.0
        %690 = vmatpush2.msra.mxu0 0.0
        %691 = vmatprep.subr.mxu0 0.0
        %692 = vmatpush2.msra.mxu0 0.0
        %693 = vmatprep.subr.mxu0 0.0
        %694 = vmatpush2.msra.mxu0 0.0
        %695 = vmatprep.subr.mxu0 0.0
        %696 = vmatpush2.msra.mxu0 0.0
        %697 = vmatprep.subr.mxu0 0.0
        %698 = vmatpush2.msra.mxu0 0.0
        %699 = vmatprep.subr.mxu0 0.0
        %700 = vmatpush2.msra.mxu0 0.0
        %701 = vmatprep.subr.mxu0 0.0
        %702 = vmatpush2.msra.mxu0 0.0
        %703 = vmatprep.mubr.f32.mxu0 0.0
        %704 = vmatmul.mubr.f32.gmra.mxu0 %v336
        %v705 = vpop.f32.mrf.mxu0
        %v706 = vadd.f32 0.0, %v705
        %v707 = vpop.f32.mrf.mxu0
        %v708 = vadd.f32 0.0, %v707
        %709 = vmatprep.mubr.f32.mxu0 0.0
        %710 = vmatmul.mubr.f32.gmra.mxu0 %v339
        %v711 = vpop.f32.mrf.mxu0
        %v712 = vadd.f32 0.0, %v711
        %v713 = vpop.f32.mrf.mxu0
        %v714 = vadd.f32 0.0, %v713
        %715 = vmatprep.mubr.f32.mxu0 0.0
        %716 = vmatmul.mubr.f32.gmra.mxu0 %v342
        %v717 = vpop.f32.mrf.mxu0
        %v718 = vadd.f32 0.0, %v717
        %v719 = vpop.f32.mrf.mxu0
        %v720 = vadd.f32 0.0, %v719
        %721 = vmatprep.mubr.f32.mxu0 0.0
        %722 = vmatmul.mubr.f32.gmra.mxu0 %v345
        %v723 = vpop.f32.mrf.mxu0
        %v724 = vadd.f32 0.0, %v723
        %v725 = vpop.f32.mrf.mxu0
        %v726 = vadd.f32 0.0, %v725
        %727 = vdwg.mxu0
        %v728 = vld [vmem:[%s2] sm:$0xff]
        %v729 = vld [vmem:[%s2 + $0x8] sm:$0xff]
        %v730 = vld [vmem:[%s2 + $0x10] sm:$0xff]
        %v731 = vld [vmem:[%s2 + $0x18] sm:$0xff]
        %733 = vset.pattern.permute.xlu0 0
        %734 = vperm.xlu0 %733, %v728
        %v735 = vpop.permute.xlu0 %734
        %738 = vset.pattern.permute.xlu0 0
        %739 = vperm.xlu0 %738, %v729
        %v740 = vpop.permute.xlu0 %739
        %743 = vset.pattern.permute.xlu0 0
        %744 = vperm.xlu0 %743, %v730
        %v745 = vpop.permute.xlu0 %744
        %748 = vset.pattern.permute.xlu0 0
        %749 = vperm.xlu0 %748, %v731
        %v750 = vpop.permute.xlu0 %749
        %v752 = vmul.f32 %v439, %v735
        %v753 = vmul.f32 %v441, %v735
        %v754 = vmul.f32 %v528, %v735
        %v755 = vmul.f32 %v530, %v735
        %v756 = vmul.f32 %v617, %v735
        %v757 = vmul.f32 %v619, %v735
        %v758 = vmul.f32 %v706, %v735
        %v759 = vmul.f32 %v708, %v735
        %v760 = vmul.f32 %v445, %v740
        %v761 = vmul.f32 %v447, %v740
        %v762 = vmul.f32 %v534, %v740
        %v763 = vmul.f32 %v536, %v740
        %v764 = vmul.f32 %v623, %v740
        %v765 = vmul.f32 %v625, %v740
        %v766 = vmul.f32 %v712, %v740
        %v767 = vmul.f32 %v714, %v740
        %v768 = vmul.f32 %v451, %v745
        %v769 = vmul.f32 %v453, %v745
        %v770 = vmul.f32 %v540, %v745
        %v771 = vmul.f32 %v542, %v745
        %v772 = vmul.f32 %v629, %v745
        %v773 = vmul.f32 %v631, %v745
        %v774 = vmul.f32 %v718, %v745
        %v775 = vmul.f32 %v720, %v745
        %v776 = vmul.f32 %v457, %v750
        %v777 = vmul.f32 %v459, %v750
        %v778 = vmul.f32 %v546, %v750
        %v779 = vmul.f32 %v548, %v750
        %v780 = vmul.f32 %v635, %v750
        %v781 = vmul.f32 %v637, %v750
        %v782 = vmul.f32 %v724, %v750
        %v783 = vmul.f32 %v726, %v750
        %v784 = vld [vmem:[%s3] sm:$0xff]
        %v785 = vld [vmem:[%s3 + $0x8] sm:$0xff]
        %v786 = vld [vmem:[%s3 + $0x10] sm:$0xff]
        %v787 = vld [vmem:[%s3 + $0x18] sm:$0xff]
        %789 = vset.pattern.permute.xlu0 0
        %790 = vperm.xlu0 %789, %v784
        %v791 = vpop.permute.xlu0 %790
        %794 = vset.pattern.permute.xlu0 0
        %795 = vperm.xlu0 %794, %v785
        %v796 = vpop.permute.xlu0 %795
        %799 = vset.pattern.permute.xlu0 0
        %800 = vperm.xlu0 %799, %v786
        %v801 = vpop.permute.xlu0 %800
        %804 = vset.pattern.permute.xlu0 0
        %805 = vperm.xlu0 %804, %v787
        %v806 = vpop.permute.xlu0 %805
        %v808 = vadd.f32 %v752, %v791
        %v809 = vadd.f32 %v753, %v791
        %v810 = vadd.f32 %v754, %v791
        %v811 = vadd.f32 %v755, %v791
        %v812 = vadd.f32 %v756, %v791
        %v813 = vadd.f32 %v757, %v791
        %v814 = vadd.f32 %v758, %v791
        %v815 = vadd.f32 %v759, %v791
        %v816 = vadd.f32 %v760, %v796
        %v817 = vadd.f32 %v761, %v796
        %v818 = vadd.f32 %v762, %v796
        %v819 = vadd.f32 %v763, %v796
        %v820 = vadd.f32 %v764, %v796
        %v821 = vadd.f32 %v765, %v796
        %v822 = vadd.f32 %v766, %v796
        %v823 = vadd.f32 %v767, %v796
        %v824 = vadd.f32 %v768, %v801
        %v825 = vadd.f32 %v769, %v801
        %v826 = vadd.f32 %v770, %v801
        %v827 = vadd.f32 %v771, %v801
        %v828 = vadd.f32 %v772, %v801
        %v829 = vadd.f32 %v773, %v801
        %v830 = vadd.f32 %v774, %v801
        %v831 = vadd.f32 %v775, %v801
        %v832 = vadd.f32 %v776, %v806
        %v833 = vadd.f32 %v777, %v806
        %v834 = vadd.f32 %v778, %v806
        %v835 = vadd.f32 %v779, %v806
        %v836 = vadd.f32 %v780, %v806
        %v837 = vadd.f32 %v781, %v806
        %v838 = vadd.f32 %v782, %v806
        %v839 = vadd.f32 %v783, %v806
        %v840 = vmax.f32 %v808, 0.0
        %v841 = vmax.f32 %v809, 0.0
        %v842 = vmax.f32 %v810, 0.0
        %v843 = vmax.f32 %v811, 0.0
        %v844 = vmax.f32 %v812, 0.0
        %v845 = vmax.f32 %v813, 0.0
        %v846 = vmax.f32 %v814, 0.0
        %v847 = vmax.f32 %v815, 0.0
        %v848 = vmax.f32 %v816, 0.0
        %v849 = vmax.f32 %v817, 0.0
        %v850 = vmax.f32 %v818, 0.0
        %v851 = vmax.f32 %v819, 0.0
        %v852 = vmax.f32 %v820, 0.0
        %v853 = vmax.f32 %v821, 0.0
        %v854 = vmax.f32 %v822, 0.0
        %v855 = vmax.f32 %v823, 0.0
        %v856 = vmax.f32 %v824, 0.0
        %v857 = vmax.f32 %v825, 0.0
        %v858 = vmax.f32 %v826, 0.0
        %v859 = vmax.f32 %v827, 0.0
        %v860 = vmax.f32 %v828, 0.0
        %v861 = vmax.f32 %v829, 0.0
        %v862 = vmax.f32 %v830, 0.0
        %v863 = vmax.f32 %v831, 0.0
        %v864 = vmax.f32 %v832, 0.0
        %v865 = vmax.f32 %v833, 0.0
        %v866 = vmax.f32 %v834, 0.0
        %v867 = vmax.f32 %v835, 0.0
        %v868 = vmax.f32 %v836, 0.0
        %v869 = vmax.f32 %v837, 0.0
        %v870 = vmax.f32 %v838, 0.0
        %v871 = vmax.f32 %v839, 0.0
        %872 = vst [vmem:[%s295] sm:$0xff] %v840
        %873 = vst [vmem:[%s295 + $0x8] sm:$0xff] %v841
        %874 = vst [vmem:[%s295 + $0x10] sm:$0xff] %v842
        %875 = vst [vmem:[%s295 + $0x18] sm:$0xff] %v843
        %876 = vst [vmem:[%s295 + $0x20] sm:$0xff] %v844
        %877 = vst [vmem:[%s295 + $0x28] sm:$0xff] %v845
        %878 = vst [vmem:[%s295 + $0x30] sm:$0xff] %v846
        %879 = vst [vmem:[%s295 + $0x38] sm:$0xff] %v847
        %880 = vst [vmem:[%s295 + $0x40] sm:$0xff] %v848
        %881 = vst [vmem:[%s295 + $0x48] sm:$0xff] %v849
        %882 = vst [vmem:[%s295 + $0x50] sm:$0xff] %v850
        %883 = vst [vmem:[%s295 + $0x58] sm:$0xff] %v851
        %884 = vst [vmem:[%s295 + $0x60] sm:$0xff] %v852
        %885 = vst [vmem:[%s295 + $0x68] sm:$0xff] %v853
        %886 = vst [vmem:[%s295 + $0x70] sm:$0xff] %v854
        %887 = vst [vmem:[%s295 + $0x78] sm:$0xff] %v855
        %888 = vst [vmem:[%s295 + $0x80] sm:$0xff] %v856
        %889 = vst [vmem:[%s295 + $0x88] sm:$0xff] %v857
        %890 = vst [vmem:[%s295 + $0x90] sm:$0xff] %v858
        %891 = vst [vmem:[%s295 + $0x98] sm:$0xff] %v859
        %892 = vst [vmem:[%s295 + $0xa0] sm:$0xff] %v860
        %893 = vst [vmem:[%s295 + $0xa8] sm:$0xff] %v861
        %894 = vst [vmem:[%s295 + $0xb0] sm:$0xff] %v862
        %895 = vst [vmem:[%s295 + $0xb8] sm:$0xff] %v863
        %896 = vst [vmem:[%s295 + $0xc0] sm:$0xff] %v864
        %897 = vst [vmem:[%s295 + $0xc8] sm:$0xff] %v865
        %898 = vst [vmem:[%s295 + $0xd0] sm:$0xff] %v866
        %899 = vst [vmem:[%s295 + $0xd8] sm:$0xff] %v867
        %900 = vst [vmem:[%s295 + $0xe0] sm:$0xff] %v868
        %901 = vst [vmem:[%s295 + $0xe8] sm:$0xff] %v869
        %902 = vst [vmem:[%s295 + $0xf0] sm:$0xff] %v870
        %903 = vst [vmem:[%s295 + $0xf8] sm:$0xff] %v871
        %s904 = sand.u32 %s131, 1
        %s905 = scalar_lea.sflag [#allocation4], %s904
        %s906 = sand.u32 %s131, 1
        %s907 = smul.addr %s906, 256
        %s908 = scalar_lea.vmem [#allocation3], %s907
        // Predicated region
        $region60: #{tpu_custom_call.1} parent=54 // pred_check
          %p909 = pneg %p141
        $region61: #{tpu_custom_call.1} parent=54 // pred_check_branch
          %911 = sbr.rel (%p909) target = $region63
        $region62: #{tpu_custom_call.1} parent=54 // pred_region
          %s912 = smul.u32 8, %s23
          %s914 = ssub.s32 4096, 4096
          %915 = vsyncadd %s905, %s914
          %s916 = smul.addr %s22, 1024
          %s917 = sadd.s32 %s912, %s916
          %s918 = smul.addr %s917, 128
          %s919 = scalar_lea.hbm %s4, %s918
          %s920 = sshll.u32 %s908, 4
          %s921 = int_to_ptr.vmem [resolvable:$true] %s920
          %926 = dma.vmem_to_hbm [thread:$0]  %s921, 4096, %s919, %s905, 1024, 32768, 64
        $region63: #{tpu_custom_call.1} parent=54 // pred_fallthru
          _
      $region55: #{tpu_custom_call.1} parent=5 // pred_fallthru
        _
      %p927 = scmp.le.s32.totalorder 2, %s13
      // Predicated region
      $region64: #{tpu_custom_call.1} parent=5 // pred_check
        %p928 = pneg %p927
      $region65: #{tpu_custom_call.1} parent=5 // pred_check_branch
        %930 = sbr.rel (%p928) target = $region67
      $region66: #{tpu_custom_call.1} parent=5 // pred_region
        %s931 = ssub.s32 %s13, 2
        // Predicated region
        $region68: #{tpu_custom_call.1} parent=66 // pred_check
          %p932 = pneg %p147
        $region69: #{tpu_custom_call.1} parent=66 // pred_check_branch
          %934 = sbr.rel (%p932) target = $region71
        $region70: #{tpu_custom_call.1} parent=66 // pred_region
          %s935 = sand.u32 %s132, 1
          %s936 = scalar_lea.sflag [#allocation4], %s935
          %s937 = sand.u32 %s132, 1
          %s938 = smul.addr %s937, 256
          %s939 = scalar_lea.vmem [#allocation3], %s938
          %940 = dma.done %s936, 4096
        $region71: #{tpu_custom_call.1} parent=66 // pred_fallthru
          _
      $region67: #{tpu_custom_call.1} parent=5 // pred_fallthru
        _
    $region6: #{tpu_custom_call.1} parent=1 // loop_footer
      %s17 = sadd.s32 1, %s13
    $region7: #{tpu_custom_call.1} parent=1 // loop_footer_branch
      %12 = sbr.rel target = $region3
    $region8: #{tpu_custom_call.1} parent=1 // loop_exit
      _
    %941 = vsyncpa [#allocation4], 1
    %s942 = scalar_lea.sflag [#allocation4], 1
    %943 = vsyncpa %s942, 1

</llo_original>
